<compile_context>
chip_gen: v7x
topology: tpu7x:2x2x1
jax: 0.10.0
libtpu: 0.0.40
codegen_flags: <defaults>
</compile_context>

<pallas_src>
import functools

import jax
import jax.numpy as jnp
from jax import lax
from jax.experimental import pallas as pl
from jax.experimental.pallas import tpu as pltpu


def _chip_defaults():
    """Per-generation defaults: (tile_rows at lanes=512, num_cores, vmem_limit)."""
    try:
        kind = jax.devices()[0].device_kind.lower()
    except Exception:
        kind = ""
    if "v5" in kind:                    # v5e: 16 MiB default scoped VMEM, 1 TC
        return 1024, 1, None
    if "v6" in kind:                    # v6e: 32 MiB default scoped VMEM, 1 TC
        return 2048, 1, None
    if "v7" in kind or "7x" in kind:    # v7x: 64 MiB VMEM per TC, 2 TCs
        return 4096, 2, 48 * 1024 * 1024
    return 1024, 1, None                # unknown chip: conservative


def _small_mul_sum_kernel(x_ref, y_ref, out_ref):
    """Single resident tile: multiply, reduce, scalar SMEM store."""
    out_ref[0, 0] = jnp.sum(
        x_ref[...].astype(jnp.float32) * y_ref[...].astype(jnp.float32)
    )


def _mul_sum_kernel(x_ref, y_ref, out_ref, acc_ref, *, tile_rows, lanes, rows,
                    chunk_rows, needs_mask, multicore):
    """grid = (num_cores, steps) [multicore] or (steps,); last axis reduces."""
    if multicore:
        step = pl.program_id(1)
        nsteps = pl.num_programs(1)
        tile_id = pl.program_id(0) * nsteps + step
    else:
        step = pl.program_id(0)
        nsteps = pl.num_programs(0)
        tile_id = step

    # Zero the per-lane accumulator at the start of each core's reduction.
    @pl.when(step == 0)
    def _():
        acc_ref[...] = jnp.zeros_like(acc_ref)

    row0 = tile_id * tile_rows  # logical (unclamped) first row of this tile

    def accumulate(mask_rows):
        def body(c, acc):
            r0 = pl.multiple_of(c * chunk_rows, chunk_rows)
            xs = x_ref[pl.ds(r0, chunk_rows), :].astype(jnp.float32)
            ys = y_ref[pl.ds(r0, chunk_rows), :].astype(jnp.float32)
            p = xs * ys
            if mask_rows:
                # Select-after-multiply: garbage rows from edge/phantom blocks
                # are discarded by the select (safe even if NaN/Inf).
                rid = row0 + r0 + lax.broadcasted_iota(
                    jnp.int32, (chunk_rows, 1), 0)
                p = jnp.where(rid < rows, p, jnp.float32(0.0))
            # Fold row-groups of 8 into (8, lanes): pure VPU adds, no XLU.
            return acc + p.reshape(chunk_rows // 8, 8, lanes).sum(axis=0)

        acc = lax.fori_loop(0, tile_rows // chunk_rows, body,
                            jnp.zeros((8, lanes), jnp.float32))
        acc_ref[...] += acc

    if needs_mask:
        is_edge = (row0 + tile_rows) > rows

        @pl.when(jnp.logical_not(is_edge))
        def _():
            accumulate(False)          # interior tiles: no mask ops at all

        @pl.when(is_edge)
        def _():
            accumulate(True)           # edge / phantom tiles: masked
    else:
        accumulate(False)

    # Single cross-lane/sublane reduction + scalar SMEM store per core.
    @pl.when(step == nsteps - 1)
    def _():
        out_ref[0, 0] = jnp.sum(acc_ref[...])


def toy_model_forward(x, y, *, tile_rows=None, num_cores=None,
                      vmem_limit_bytes=None):
    """pred = sum(x * y), matching torch.sum(torch.multiply(x, y))."""
    assert x.shape == y.shape, "ToyModel multiplies same-shape tensors"
    n = x.size

    d_tile, d_cores, d_vmem = _chip_defaults()
    tile_rows = d_tile if tile_rows is None else tile_rows
    num_cores = d_cores if num_cores is None else num_cores
    vmem_limit_bytes = d_vmem if vmem_limit_bytes is None else vmem_limit_bytes

    xf = x.reshape(-1)
    yf = y.reshape(-1)

    # Lane width: largest of 512/256/128 dividing n -> zero-copy 2-D reshape.
    lanes = None
    for cand in (512, 256, 128):
        if n % cand == 0:
            lanes = cand
            break
    if lanes is None:
        # TODO(synk): truly ragged sizes still pay one small pad-to-128 copy;
        # a lane-dense 2-D view needs a contiguous multiple-of-`lanes` buffer.
        lanes = 128
        pad = lanes - (n % lanes)
        xf = jnp.concatenate([xf, jnp.zeros((pad,), xf.dtype)])
        yf = jnp.concatenate([yf, jnp.zeros((pad,), yf.dtype)])

    rows = xf.size // lanes
    x2 = xf.reshape(rows, lanes)
    y2 = yf.reshape(rows, lanes)

    cost = pl.CostEstimate(flops=2 * n, transcendentals=0,
                           bytes_accessed=int(x.nbytes) + int(y.nbytes) + 4)

    # ---- Small-input path: one resident tile, trivial kernel. -------------
    if rows < 8:
        out = pl.pallas_call(
            _small_mul_sum_kernel,
            out_shape=jax.ShapeDtypeStruct((1, 1), jnp.float32),
            grid_spec=pltpu.PrefetchScalarGridSpec(
                num_scalar_prefetch=0,
                grid=(1,),
                in_specs=[pl.BlockSpec((rows, lanes), lambda i: (0, 0)),
                          pl.BlockSpec((rows, lanes), lambda i: (0, 0))],
                out_specs=pl.BlockSpec((1, 1), lambda i: (0, 0),
                                       memory_space=pltpu.SMEM),
            ),
            compiler_params=pltpu.CompilerParams(
                dimension_semantics=(pltpu.ARBITRARY,)),
            cost_estimate=cost,
        )(x2, y2)
        return out[0, 0]

    # ---- Streaming path. ---------------------------------------------------
    # Keep block bytes ~constant vs lane width, clamp to the array, multiple
    # of 8 sublanes.  v5e: 2 MiB/block, v6e: 4 MiB, v7x: 8 MiB (f32).
    tile_rows = tile_rows * (512 // lanes)
    tile_rows = max(8, (min(tile_rows, rows) // 8) * 8)
    tiles_total = pl.cdiv(rows, tile_rows)
    num_cores = max(1, min(num_cores, tiles_total))

    # Row-chunk per inner-loop iteration (<= 8 f32 vregs of product).
    chunk_rows = 8
    for cand in (64, 32, 16, 8):
        if cand * lanes <= 8192 and tile_rows % cand == 0:
            chunk_rows = cand
            break

    if num_cores > 1:
        tiles_per_core = pl.cdiv(tiles_total, num_cores)
        uniform = tiles_per_core * num_cores == tiles_total
        if uniform:
            def in_index(c, i):
                return (c * tiles_per_core + i, 0)
        else:
            # Only the last core can have phantom steps; clamping makes them
            # revisit that core's previous block (no extra HBM DMA) and the
            # kernel masks their contribution to zero.
            def in_index(c, i):
                return (jnp.minimum(c * tiles_per_core + i, tiles_total - 1), 0)
        grid = (num_cores, tiles_per_core)
        out_index = lambda c, i: (c, 0)
        dims = (pltpu.CORE_PARALLEL, pltpu.ARBITRARY)
        needs_mask = (not uniform) or (tiles_total * tile_rows != rows)
    else:
        def in_index(i):
            return (i, 0)
        grid = (tiles_total,)
        out_index = lambda i: (0, 0)
        dims = (pltpu.ARBITRARY,)
        needs_mask = tiles_total * tile_rows != rows

    kernel = functools.partial(
        _mul_sum_kernel, tile_rows=tile_rows, lanes=lanes, rows=rows,
        chunk_rows=chunk_rows, needs_mask=needs_mask, multicore=num_cores > 1)

    cp_kwargs = dict(dimension_semantics=dims)
    if vmem_limit_bytes is not None:
        cp_kwargs["vmem_limit_bytes"] = vmem_limit_bytes

    partials = pl.pallas_call(
        kernel,
        out_shape=jax.ShapeDtypeStruct((num_cores, 1), jnp.float32),
        grid_spec=pltpu.PrefetchScalarGridSpec(
            num_scalar_prefetch=0,
            grid=grid,
            in_specs=[pl.BlockSpec((tile_rows, lanes), in_index),
                      pl.BlockSpec((tile_rows, lanes), in_index)],
            out_specs=pl.BlockSpec((1, 1), out_index, memory_space=pltpu.SMEM),
            scratch_shapes=[pltpu.VMEM((8, lanes), jnp.float32)],
        ),
        compiler_params=pltpu.CompilerParams(**cp_kwargs),
        cost_estimate=cost,
    )(x2, y2)

    # Add the per-core partial sums (num_cores scalars).
    return jnp.sum(partials)


if __name__ == "__main__":
    root = jax.random.PRNGKey(0)

    cases = [
        # (shape, forward kwargs)
        ((2, 4, 16, 16), {}),              # spec shape -> small-input path
        ((125, 1024), {"tile_rows": 64}),  # multi-step grid + edge-tile mask
        ((3, 5, 40, 40), {}),              # ragged n -> lane-pad path
    ]
    for idx, (shape, kw) in enumerate(cases):
        kx, ky = jax.random.split(jax.random.fold_in(root, idx))
        x = jax.random.normal(kx, shape, dtype=jnp.float32)
        y = jax.random.normal(ky, shape, dtype=jnp.float32)
        pred = jax.block_until_ready(toy_model_forward(x, y, **kw))
        ref = jnp.sum(x * y)
        n = x.size
        atol = 1e-5 + 1e-6 * n   # f32 accumulation-order slack
        assert jnp.allclose(pred, ref, rtol=1e-3, atol=atol), (shape, pred, ref)
    print("KERNEL_OK")
</pallas_src>

<mosaic_0001>
module attributes {stable_mosaic.version = 11 : i64} {
  func.func @_small_mul_sum_kernel(%arg0: i32, %arg1: memref<4x512xf32, #tpu.memory_space<vmem>>, %arg2: memref<4x512xf32, #tpu.memory_space<vmem>>, %arg3: memref<1x1xf32, #tpu.memory_space<smem>>) attributes {dimension_semantics = [#tpu.dimension_semantics<arbitrary>], iteration_bounds = array<i64: 1>, scalar_prefetch = 0 : i64, scratch_operands = 0 : i64, tpu.core_type = #tpu.core_type<tc>, window_params = [{pipeline_mode = #tpu.pipeline_mode<synchronous>, transform_indices = @transform_0, window_bounds = array<i64: 4, 512>}, {pipeline_mode = #tpu.pipeline_mode<synchronous>, transform_indices = @transform_1, window_bounds = array<i64: 4, 512>}, {transform_indices = @transform_2, window_bounds = array<i64: 1, 1>}]} {
    %c0 = arith.constant 0 : index
    %c0_0 = arith.constant 0 : index
    %0 = vector.load %arg1[%c0, %c0_0] : memref<4x512xf32, #tpu.memory_space<vmem>>, vector<4x512xf32>
    %c0_1 = arith.constant 0 : index
    %c0_2 = arith.constant 0 : index
    %1 = vector.load %arg2[%c0_1, %c0_2] : memref<4x512xf32, #tpu.memory_space<vmem>>, vector<4x512xf32>
    %2 = arith.mulf %0, %1 : vector<4x512xf32>
    %3 = vector.shape_cast %2 : vector<4x512xf32> to vector<1x4x512xf32>
    %cst = arith.constant dense<0.000000e+00> : vector<1xf32>
    %4 = vector.multi_reduction <add>, %3, %cst [1, 2] : vector<1x4x512xf32> to vector<1xf32>
    %5 = vector.shape_cast %4 : vector<1xf32> to vector<1x1x1xf32>
    %6 = vector.extract %5[0, 0, 0] : f32 from vector<1x1x1xf32>
    %c0_3 = arith.constant 0 : index
    %c0_4 = arith.constant 0 : index
    %7 = memref.load %arg3[%c0_3, %c0_4] : memref<1x1xf32, #tpu.memory_space<smem>>
    memref.store %6, %arg3[%c0_3, %c0_4] : memref<1x1xf32, #tpu.memory_space<smem>>
    return
  }
  func.func @transform_0(%arg0: i32) -> (i32, i32) {
    %c0_i32 = arith.constant 0 : i32
    %c0_i32_0 = arith.constant 0 : i32
    %c0_i32_1 = arith.constant 0 : i32
    return %c0_i32, %c0_i32_0 : i32, i32
  }
  func.func @transform_1(%arg0: i32) -> (i32, i32) {
    %c0_i32 = arith.constant 0 : i32
    %c0_i32_0 = arith.constant 0 : i32
    %c0_i32_1 = arith.constant 0 : i32
    return %c0_i32, %c0_i32_0 : i32, i32
  }
  func.func @transform_2(%arg0: i32) -> (i32, i32) {
    %c0_i32 = arith.constant 0 : i32
    %c0_i32_0 = arith.constant 0 : i32
    %c0_i32_1 = arith.constant 0 : i32
    return %c0_i32, %c0_i32_0 : i32, i32
  }
}

</mosaic_0001>

<llo_original>
// kernel: tpu_custom_call.1
$region0: #{tpu_custom_call.1}
  #allocation0 [shape = 'u32[]', space=smem, size = 0x4, offset = 0x4, fixed_abs, tag = 'smem constant byte address 0x4 - core index']
  #allocation1 [shape = 'u32[144,128]{1,0:T(1,128)}', space=vmem, size = 0x12000, scoped, tag = 'internal scratch']
  %s0 = inlined_call_operand.hbm [shape: f32[4,512], index: 0, kind: input, shape index: {}]
  %s1 = inlined_call_operand.hbm [shape: f32[4,512], index: 1, kind: input, shape index: {}]
  %s2 = inlined_call_operand.hbm [shape: f32[1,1], index: 2, kind: output, shape index: {}]
  %s3 = sld [smem:[#allocation0]]
  $region26: #{tpu_custom_call.1} parent=0
    _
  %s5 = ssub.s32 1, %s3
  %s6 = scalar_select 0, %s5, %s3
  $region1: #{tpu_custom_call.1} parent=0
    #allocation2 [shape = 'u8[8192]{0}', space=vmem, size = 0x2000, scoped, tag = 'input window, operand 0, single buffered']
    #allocation3 [shape = 's32[1]{0}', space=sflag, size = 0x4, scoped, tag = 'scoped memory for tpu_custom_call.1']
    #allocation4 [shape = 's32[1]{0}', space=sflag, size = 0x4, scoped, tag = 'scoped memory for tpu_custom_call.1']
    #allocation5 [shape = 'u8[8192]{0}', space=vmem, size = 0x2000, scoped, tag = 'input window, operand 1, single buffered']
    #allocation6 [shape = 's32[1]{0}', space=sflag, size = 0x4, scoped, tag = 'scoped memory for tpu_custom_call.1']
    #allocation7 [shape = 'u8[512]{0}', space=smem, size = 0x200, scoped, tag = 'output window, operand 0, single buffered']
    %7 = vsyncpa [#allocation3], 0
    %8 = vsyncpa [#allocation6], 0
    %9 = vsyncpa [#allocation4], 0
    // Predicated region
    $region2: #{tpu_custom_call.1} parent=1 // pred_check
      _
    $region3: #{tpu_custom_call.1} parent=1 // pred_check_branch
      %11 = sbr.rel (0) target = $region5
    $region4: #{tpu_custom_call.1} parent=1 // pred_region
      %s13 = ssub.s32 256, 256
      %14 = vsyncadd [#allocation3], %s13
      %s16 = sshll.u32 [#allocation2], 4
      %s17 = int_to_ptr.vmem [resolvable:$true] %s16
      %19 = dma.hbm_to_vmem [thread:$0]  %s0, 256, %s17, [#allocation3]
    $region5: #{tpu_custom_call.1} parent=1 // pred_fallthru
      _
    // Predicated region
    $region6: #{tpu_custom_call.1} parent=1 // pred_check
      _
    $region7: #{tpu_custom_call.1} parent=1 // pred_check_branch
      %21 = sbr.rel (0) target = $region9
    $region8: #{tpu_custom_call.1} parent=1 // pred_region
      %s23 = ssub.s32 256, 256
      %24 = vsyncadd [#allocation6], %s23
      %s26 = sshll.u32 [#allocation5], 4
      %s27 = int_to_ptr.vmem [resolvable:$true] %s26
      %29 = dma.hbm_to_vmem [thread:$0]  %s1, 256, %s27, [#allocation6]
    $region9: #{tpu_custom_call.1} parent=1 // pred_fallthru
      _
    // Predicated region
    $region10: #{tpu_custom_call.1} parent=1 // pred_check
      _
    $region11: #{tpu_custom_call.1} parent=1 // pred_check_branch
      %31 = sbr.rel (0) target = $region13
    $region12: #{tpu_custom_call.1} parent=1 // pred_region
      %32 = dma.done [#allocation3], 256
    $region13: #{tpu_custom_call.1} parent=1 // pred_fallthru
      _
    // Predicated region
    $region14: #{tpu_custom_call.1} parent=1 // pred_check
      _
    $region15: #{tpu_custom_call.1} parent=1 // pred_check_branch
      %34 = sbr.rel (0) target = $region17
    $region16: #{tpu_custom_call.1} parent=1 // pred_region
      %35 = dma.done [#allocation6], 256
    $region17: #{tpu_custom_call.1} parent=1 // pred_fallthru
      _
    %v36 = vld [vmem:[#allocation2] sm:$0xff]
    %v37 = vld [vmem:[#allocation2 + $0x8] sm:$0xff]
    %v38 = vld [vmem:[#allocation5] sm:$0xff]
    %v39 = vld [vmem:[#allocation5 + $0x8] sm:$0xff]
    %v40 = vmul.f32 %v36, %v38
    %v41 = vmul.f32 %v37, %v39
    %v44 = vcombine.high %v40, %v40
    %v45 = vcombine.high %v41, %v41
    %vm48 = vcmask 1043456
    %v49 = vsel %vm48, %v40, 0.0
    %v50 = vsel %vm48, %v44, 0.0
    %v51 = vadd.f32 %v49, %v50
    %v52 = vsel %vm48, %v41, 0.0
    %v53 = vadd.f32 %v51, %v52
    %v54 = vsel %vm48, %v45, 0.0
    %v55 = vadd.f32 %v53, %v54
    %56 = vadd.xlane.f32.xlu0 %v55
    %v57 = vpop.xlane.xlu0 %56
    %v58 = vrot.slane %v57, 4
    %v59 = vadd.f32 %v57, %v58
    %v60 = vrot.slane %v59, 2
    %v61 = vadd.f32 %v59, %v60
    %v62 = vrot.slane %v61, 1
    %v63 = vadd.f32 %v61, %v62
    %s64 = vtos %v63
    %s65 = scalar_lea.smem [#allocation7], 0
    %66 = sst [smem:[%s65]] %s64
    // Predicated region
    $region18: #{tpu_custom_call.1} parent=1 // pred_check
      _
    $region19: #{tpu_custom_call.1} parent=1 // pred_check_branch
      %68 = sbr.rel (0) target = $region21
    $region20: #{tpu_custom_call.1} parent=1 // pred_region
      %s70 = ssub.s32 16, 16
      %71 = vsyncadd [#allocation4], %s70
      %74 = dma.smem_to_hbm [#allocation7], 16, %s2, [#allocation4]
    $region21: #{tpu_custom_call.1} parent=1 // pred_fallthru
      _
    // Predicated region
    $region22: #{tpu_custom_call.1} parent=1 // pred_check
      _
    $region23: #{tpu_custom_call.1} parent=1 // pred_check_branch
      %76 = sbr.rel (0) target = $region25
    $region24: #{tpu_custom_call.1} parent=1 // pred_region
      %77 = dma.done [#allocation4], 16
    $region25: #{tpu_custom_call.1} parent=1 // pred_fallthru
      _
    %78 = sfence
    %79 = vsyncpa [#allocation3], 1
    %80 = vsyncpa [#allocation6], 1
    %81 = vsyncpa [#allocation4], 1

</llo_original>
